<compile_context>
chip_gen: v7x
topology: tpu7x:2x2x1
jax: 0.10.0
libtpu: 0.0.40
codegen_flags: <defaults>
</compile_context>

<pallas_src>
import functools

import jax
import jax.numpy as jnp
from jax.experimental import pallas as pl
from jax.experimental.pallas import tpu as pltpu


def slice_decoder_kernel(x_ref, w_ref, pos_ref, o_ref, *, out_channels, wh):
    """One (batch, token-tile) grid step.

    x_ref:   (1, tn, D)        token tile
    w_ref:   (D, C*W*H)        replicated + un-patchify-permuted weight
    pos_ref: (1, C*W*H)        precomputed inner_pos @ W^T + bias (same column order)
    o_ref:   (1, C, tn, W*H)   output tile, already in the final layout
    """
    x = x_ref[0]                                                     # (tn, D)
    y = jnp.dot(x, w_ref[...], preferred_element_type=jnp.float32)   # (tn, C*W*H)
    y = (y + pos_ref[...]).astype(o_ref.dtype)
    # Channel split is a static lane slice (W*H = 256 here, 128-aligned); each
    # store is a full-width vst into its own (tn, W*H) region of the out block.
    for c in range(out_channels):
        o_ref[0, c, :, :] = y[:, c * wh:(c + 1) * wh]


def _choose_token_tile(n, per_token_bytes, budget_bytes):
    """Token-tile size tn and the (possibly padded) token count.

    tn is a multiple of 8 (or == n when n is small), bounded so the
    double-buffered per-token VMEM stays under `budget_bytes`.
    """
    cap = max(8, budget_bytes // max(1, per_token_bytes))
    cap = min(cap, 1024)                     # big tiles amortize ~0.35us/step overhead
    if n <= cap:
        return n, n
    for tn in range(min(cap, n), 7, -1):     # largest clean divisor, multiple of 8
        if n % tn == 0 and tn % 8 == 0:
            return tn, n
    tn = max(8, (min(cap, 512) // 8) * 8)    # no clean divisor: pad the token axis
    n_pad = ((n + tn - 1) // tn) * tn
    return tn, n_pad


def slice_decoder_forward(x, inner_pos, weight, bias, *, slice_size, patch_size,
                          out_channels):
    """x: (B, n, embed_dim) -> (B, C, n, W, H)."""
    B, n, D = x.shape
    W, H = slice_size
    w, h = patch_size
    Wb, Hb = W // w, H // h
    M = Wb * Hb
    C = out_channels
    P = C * w * h
    WH = W * H
    CWH = C * WH
    assert inner_pos.shape == (M, D)
    assert weight.shape == (P, D)        # PyTorch Linear: (out_features, in_features)
    assert bias.shape == (P,)

    f32 = jnp.float32
    wt = weight.astype(f32)

    # --- Fold patch replication + un-patchify permutation into the weight. ---
    # The torch reshape splits the Linear output dim P as (w, h, C):
    #   p = (iw*h + ih)*C + c
    # and the final per-token pixel layout orders columns as
    #   j = c*W*H + X*H + Y   with X = iWb*w + iw, Y = iHb*h + ih.
    w_whc = wt.reshape(w, h, C, D)                                    # [iw, ih, c, d]
    w_rep = jnp.broadcast_to(w_whc[None, :, None, :, :, :],
                             (Wb, w, Hb, h, C, D))                    # [iWb, iw, iHb, ih, c, d]
    w_final = jnp.transpose(w_rep, (4, 0, 1, 2, 3, 5)).reshape(CWH, D)
    w_final = jnp.transpose(w_final)                                  # (D, C*W*H)
    # TODO(synk): for production-scale W*H (e.g. 224x224, D=768) W_final is too large
    # for a single constant VMEM block; add a column-tile grid axis over C*W*H there.

    # Hoisted positional/bias term, permuted into the same column order.
    pos_p = jnp.einsum("md,pd->mp", inner_pos.astype(f32), wt) \
        + bias.astype(f32)[None, :]                                   # (M, P)
    pos6 = pos_p.reshape(Wb, Hb, w, h, C)                             # [iWb, iHb, iw, ih, c]
    pos_final = jnp.transpose(pos6, (4, 0, 2, 1, 3)).reshape(1, CWH)  # (c, iWb, iw, iHb, ih)

    # --- Token tiling under a cross-generation VMEM budget. ---
    out_bytes = jnp.dtype(x.dtype).itemsize
    const_bytes = 2 * (D * CWH * 4) + 2 * (CWH * 4)         # double-buffered constants
    per_token_bytes = 2 * (D * 4) + 2 * (CWH * out_bytes)   # double-buffered x + out tile
    budget = 24 * 1024 * 1024                               # safe on v5e / v6e / v7x
    tn, n_pad = _choose_token_tile(n, per_token_bytes, max(budget - const_bytes, 1 << 20))

    x_in = x if n_pad == n else jnp.pad(x, ((0, 0), (0, n_pad - n), (0, 0)))
    # NOTE: we keep the (B, n_tiles) grid (no B*n flattening): the output keeps C
    # between B and n, so a token tile cannot straddle batch boundaries anyway.
    grid = (B, n_pad // tn)

    out_flat = pl.pallas_call(
        functools.partial(slice_decoder_kernel, out_channels=C, wh=WH),
        out_shape=jax.ShapeDtypeStruct((B, C, n_pad, WH), x.dtype),
        grid_spec=pltpu.PrefetchScalarGridSpec(
            num_scalar_prefetch=0,
            grid=grid,
            in_specs=[
                pl.BlockSpec((1, tn, D), lambda b, t: (b, t, 0)),   # x token tile
                pl.BlockSpec((D, CWH), lambda b, t: (0, 0)),        # weight (constant)
                pl.BlockSpec((1, CWH), lambda b, t: (0, 0)),        # pos table (constant)
            ],
            out_specs=pl.BlockSpec((1, C, tn, WH), lambda b, t: (b, 0, t, 0)),
        ),
        compiler_params=pltpu.CompilerParams(
            dimension_semantics=("parallel", "parallel"),
            vmem_limit_bytes=32 * 1024 * 1024,   # budget + margin; < v7x 64 MiB physical
        ),
    )(x_in, w_final, pos_final)

    if n_pad != n:
        out_flat = out_flat[:, :, :n, :]
    # Free trailing split: flat pixel index j within a channel is X*H + Y.
    return out_flat.reshape(B, C, n, W, H)


def slice_decoder_reference(x, inner_pos, weight, bias, *, slice_size, patch_size,
                            out_channels):
    """Plain-JAX reference mirroring the PyTorch forward exactly."""
    B, n, D = x.shape
    W, H = slice_size
    w, h = patch_size
    Wb, Hb = W // w, H // h
    M = Wb * Hb
    C = out_channels
    xr = jnp.broadcast_to(x[:, :, None, :], (B, n, M, D)) + inner_pos[None, None]
    y = xr @ weight.T + bias                                  # (B, n, M, C*w*h)
    y = y.reshape(B, n, Wb, Hb, w, h, C)                      # matches torch reshape
    y = jnp.transpose(y, (0, 6, 1, 2, 4, 3, 5))               # (B, C, n, Wb, w, Hb, h)
    return y.reshape(B, C, n, W, H)


if __name__ == "__main__":
    # small, forward-consistent shapes
    B, n, D = 2, 4, 32
    slice_size = (16, 16)
    patch_size = (4, 4)
    C = 3
    Wb, Hb = slice_size[0] // patch_size[0], slice_size[1] // patch_size[1]
    M = Wb * Hb                               # 16
    P = C * patch_size[0] * patch_size[1]     # 48

    key = jax.random.PRNGKey(0)
    k_x, k_pos, k_w, k_b = jax.random.split(key, 4)

    x = jax.random.normal(k_x, (B, n, D), jnp.float32)
    # PyTorch inits inner_pos to zeros; use small nonzero values so the hoisted
    # positional path is actually exercised by the check.
    inner_pos = 0.01 * jax.random.normal(k_pos, (M, D), jnp.float32)
    weight = 0.02 * jax.random.normal(k_w, (P, D), jnp.float32)
    bias = 0.02 * jax.random.normal(k_b, (P,), jnp.float32)

    out = slice_decoder_forward(x, inner_pos, weight, bias,
                                slice_size=slice_size, patch_size=patch_size,
                                out_channels=C)
    out = jax.block_until_ready(out)

    ref = slice_decoder_reference(x, inner_pos, weight, bias,
                                  slice_size=slice_size, patch_size=patch_size,
                                  out_channels=C)

    assert out.shape == (B, C, n, slice_size[0], slice_size[1]), out.shape
    assert jnp.allclose(out, ref, atol=1e-5, rtol=1e-5), "mismatch vs reference"
    print("KERNEL_OK")
</pallas_src>

<mosaic_0001>
module attributes {stable_mosaic.version = 11 : i64} {
  func.func @slice_decoder_kernel(%arg0: i32, %arg1: i32, %arg2: memref<1x4x32xf32, #tpu.memory_space<vmem>>, %arg3: memref<32x768xf32, #tpu.memory_space<vmem>>, %arg4: memref<1x768xf32, #tpu.memory_space<vmem>>, %arg5: memref<1x3x4x256xf32, #tpu.memory_space<vmem>>) attributes {dimension_semantics = [#tpu.dimension_semantics<parallel>, #tpu.dimension_semantics<parallel>], iteration_bounds = array<i64: 2, 1>, scalar_prefetch = 0 : i64, scratch_operands = 0 : i64, tpu.core_type = #tpu.core_type<tc>, window_params = [{transform_indices = @transform_0, window_bounds = array<i64: 1, 4, 32>}, {pipeline_mode = #tpu.pipeline_mode<synchronous>, transform_indices = @transform_1, window_bounds = array<i64: 32, 768>}, {pipeline_mode = #tpu.pipeline_mode<synchronous>, transform_indices = @transform_2, window_bounds = array<i64: 1, 768>}, {transform_indices = @transform_3, window_bounds = array<i64: 1, 3, 4, 256>}]} {
    %c0 = arith.constant 0 : index
    %c0_0 = arith.constant 0 : index
    %c0_1 = arith.constant 0 : index
    %0 = vector.load %arg2[%c0, %c0_0, %c0_1] : memref<1x4x32xf32, #tpu.memory_space<vmem>>, vector<1x4x32xf32>
    %1 = vector.shape_cast %0 : vector<1x4x32xf32> to vector<4x32xf32>
    %c0_2 = arith.constant 0 : index
    %c0_3 = arith.constant 0 : index
    %2 = vector.load %arg3[%c0_2, %c0_3] : memref<32x768xf32, #tpu.memory_space<vmem>>, vector<32x768xf32>
    %cst = arith.constant dense<0.000000e+00> : vector<4x768xf32>
    %3 = tpu.matmul %1, %2, %cst {dimension_numbers = #tpu.dot_dimension_numbers<[1], [0], [0], [1], [0, 0, 1, 1], [], []>} : vector<4x32xf32>, vector<32x768xf32>, vector<4x768xf32> -> vector<4x768xf32>
    %c0_4 = arith.constant 0 : index
    %c0_5 = arith.constant 0 : index
    %4 = vector.load %arg4[%c0_4, %c0_5] : memref<1x768xf32, #tpu.memory_space<vmem>>, vector<1x768xf32>
    %5 = vector.broadcast %4 : vector<1x768xf32> to vector<4x768xf32>
    %6 = arith.addf %3, %5 : vector<4x768xf32>
    %7 = vector.extract_strided_slice %6 {offsets = [0, 0], sizes = [4, 256], strides = [1, 1]} : vector<4x768xf32> to vector<4x256xf32>
    %c0_6 = arith.constant 0 : index
    %c0_7 = arith.constant 0 : index
    %c0_8 = arith.constant 0 : index
    %c0_9 = arith.constant 0 : index
    %8 = vector.load %arg5[%c0_6, %c0_7, %c0_8, %c0_9] : memref<1x3x4x256xf32, #tpu.memory_space<vmem>>, vector<1x1x4x256xf32>
    %9 = vector.shape_cast %8 : vector<1x1x4x256xf32> to vector<4x256xf32>
    %10 = vector.shape_cast %7 : vector<4x256xf32> to vector<1x1x4x256xf32>
    tpu.vector_store %arg5[%c0_6, %c0_7, %c0_8, %c0_9], %10 {strides = array<i32>} : memref<1x3x4x256xf32, #tpu.memory_space<vmem>>, vector<1x1x4x256xf32>,
    %11 = vector.extract_strided_slice %6 {offsets = [0, 256], sizes = [4, 256], strides = [1, 1]} : vector<4x768xf32> to vector<4x256xf32>
    %c0_10 = arith.constant 0 : index
    %c1 = arith.constant 1 : index
    %c0_11 = arith.constant 0 : index
    %c0_12 = arith.constant 0 : index
    %12 = vector.load %arg5[%c0_10, %c1, %c0_11, %c0_12] : memref<1x3x4x256xf32, #tpu.memory_space<vmem>>, vector<1x1x4x256xf32>
    %13 = vector.shape_cast %12 : vector<1x1x4x256xf32> to vector<4x256xf32>
    %14 = vector.shape_cast %11 : vector<4x256xf32> to vector<1x1x4x256xf32>
    tpu.vector_store %arg5[%c0_10, %c1, %c0_11, %c0_12], %14 {strides = array<i32>} : memref<1x3x4x256xf32, #tpu.memory_space<vmem>>, vector<1x1x4x256xf32>,
    %15 = vector.extract_strided_slice %6 {offsets = [0, 512], sizes = [4, 256], strides = [1, 1]} : vector<4x768xf32> to vector<4x256xf32>
    %c0_13 = arith.constant 0 : index
    %c2 = arith.constant 2 : index
    %c0_14 = arith.constant 0 : index
    %c0_15 = arith.constant 0 : index
    %16 = vector.load %arg5[%c0_13, %c2, %c0_14, %c0_15] : memref<1x3x4x256xf32, #tpu.memory_space<vmem>>, vector<1x1x4x256xf32>
    %17 = vector.shape_cast %16 : vector<1x1x4x256xf32> to vector<4x256xf32>
    %18 = vector.shape_cast %15 : vector<4x256xf32> to vector<1x1x4x256xf32>
    tpu.vector_store %arg5[%c0_13, %c2, %c0_14, %c0_15], %18 {strides = array<i32>} : memref<1x3x4x256xf32, #tpu.memory_space<vmem>>, vector<1x1x4x256xf32>,
    return
  }
  func.func @transform_0(%arg0: i32, %arg1: i32) -> (i32, i32, i32) {
    %c0_i32 = arith.constant 0 : i32
    %c0_i32_0 = arith.constant 0 : i32
    return %arg0, %arg1, %c0_i32 : i32, i32, i32
  }
  func.func @transform_1(%arg0: i32, %arg1: i32) -> (i32, i32) {
    %c0_i32 = arith.constant 0 : i32
    %c0_i32_0 = arith.constant 0 : i32
    %c0_i32_1 = arith.constant 0 : i32
    return %c0_i32, %c0_i32_0 : i32, i32
  }
  func.func @transform_2(%arg0: i32, %arg1: i32) -> (i32, i32) {
    %c0_i32 = arith.constant 0 : i32
    %c0_i32_0 = arith.constant 0 : i32
    %c0_i32_1 = arith.constant 0 : i32
    return %c0_i32, %c0_i32_0 : i32, i32
  }
  func.func @transform_3(%arg0: i32, %arg1: i32) -> (i32, i32, i32, i32) {
    %c0_i32 = arith.constant 0 : i32
    %c0_i32_0 = arith.constant 0 : i32
    %c0_i32_1 = arith.constant 0 : i32
    return %arg0, %c0_i32, %arg1, %c0_i32_0 : i32, i32, i32, i32
  }
}

</mosaic_0001>

<llo_original>
// kernel: tpu_custom_call.1
$region0: #{tpu_custom_call.1}
  #allocation0 [shape = 'u32[]', space=smem, size = 0x4, offset = 0x4, fixed_abs, tag = 'smem constant byte address 0x4 - core index']
  #allocation1 [shape = 'u32[144,128]{1,0:T(1,128)}', space=vmem, size = 0x12000, scoped, tag = 'internal scratch']
  %s0 = inlined_call_operand.hbm [shape: f32[2,4,32], index: 0, kind: input, shape index: {}]
  %s1 = inlined_call_operand.hbm [shape: f32[32,768], index: 1, kind: input, shape index: {}]
  %s2 = inlined_call_operand.vmem [shape: f32[1,768], index: 2, kind: input, shape index: {}]
  %s3 = inlined_call_operand.hbm [shape: f32[2,3,4,256], index: 3, kind: output, shape index: {}]
  %s4 = sld [smem:[#allocation0]]
  $region53: #{tpu_custom_call.1} parent=0
    _
  %s6 = ssub.s32 1, %s4
  %s7 = scalar_select 0, %s6, %s4
  $region1: #{tpu_custom_call.1} parent=0
    #allocation2 [shape = 'u8[4096]{0}', space=vmem, size = 0x1000, scoped, tag = 'input window, operand 0']
    #allocation3 [shape = 's32[2]{0}', space=sflag, size = 0x8, scoped, tag = 'scoped memory for tpu_custom_call.1']
    #allocation4 [shape = 's32[2]{0}', space=sflag, size = 0x8, scoped, tag = 'scoped memory for tpu_custom_call.1']
    #allocation5 [shape = 'u8[98304]{0}', space=vmem, size = 0x18000, scoped, tag = 'input window, operand 1, single buffered']
    #allocation6 [shape = 's32[1]{0}', space=sflag, size = 0x4, scoped, tag = 'scoped memory for tpu_custom_call.1']
    #allocation7 [shape = 'u8[24576]{0}', space=vmem, size = 0x6000, scoped, tag = 'output window, operand 0']
    %8 = vsyncpa [#allocation3], 0
    %s9 = scalar_lea.sflag [#allocation3], 1
    %10 = vsyncpa %s9, 0
    %11 = vsyncpa [#allocation6], 0
    %12 = vsyncpa [#allocation4], 0
    %s13 = scalar_lea.sflag [#allocation4], 1
    %14 = vsyncpa %s13, 0
    loop: start=0, step=1, limit=4
    $region2: #{tpu_custom_call.1} parent=1 // loop_pre_header
      _
    $region3: #{tpu_custom_call.1} parent=1 // loop_header
      %s16 = sphi 0, %s20
      %p17 = scmp.ge.s32.totalorder %s16, 4
      %s23 = sphi 0, %s35
      %s24 = sphi 0, %s31
      %s25 = sphi 0, %s23
      %s26 = sphi 0, %s24
      %s27 = sphi 0, %s25
      %s28 = sphi 0, %s26
      %s40 = sphi 0, %s42
      %s43 = sphi 0, %s40
      %s44 = sphi 0, %s43
      %s60 = sphi 0, %s44
      %s64 = sphi 0, %s64
      %s66 = sphi 0, %s64
      %s67 = sphi 0, %s66
      %s81 = sphi 0, %s67
      %s85 = sphi 0, %s85
      %s87 = sphi 0, %s85
      %s88 = sphi 0, %s87
      %s102 = sphi 0, %s88
      %s110 = sphi 0, %s112
      %s113 = sphi 0, %s110
      %s114 = sphi 0, %s113
      %s130 = sphi 0, %s114
    $region4: #{tpu_custom_call.1} parent=1 // loop_header_branch
      %19 = sbr.rel (%p17) target = $region8
    $region5: #{tpu_custom_call.1} parent=1 // loop_body
      %s21 = ssub.s32 %s16, 1
      %s22 = ssub.s32 %s16, 2
      %s29 = sadd.s32 1, %s24
      %p30 = scmp.ge.s32.totalorder %s29, 1
      %s31 = scalar_select %p30, 0, %s29
      %s32 = sadd.s32 1, %s23
      %s33 = scalar_select %p30, %s32, %s23
      %p34 = scmp.ge.s32.totalorder %s33, 2
      %s35 = scalar_select %p34, 0, %s33
      %s36 = ssub.s32 %s23, %s35
      %s37 = ssub.s32 %s24, %s31
      %s38 = sor.u32 %s36, %s37
      %p39 = scmp.eq.s32.totalorder %s38, 0
      %s41 = sadd.s32 %s40, 1
      %s42 = scalar_select %p39, %s40, %s41
      %p45 = pneg %p39
      %p46 = scmp.eq.s32.totalorder %s16, 1
      %p47 = por %p45, %p46
      %p48 = scmp.ne.s32.totalorder %s40, %s43
      %p49 = scmp.eq.s32.totalorder %s16, 0
      %p50 = por %p48, %p49
      %p51 = scmp.ne.s32.totalorder %s40, %s43
      %p52 = scmp.eq.s32.totalorder %s21, 1
      %p53 = por %p51, %p52
      %p54 = scmp.ne.s32.totalorder %s43, %s44
      %p55 = scmp.eq.s32.totalorder %s21, 0
      %p56 = por %p54, %p55
      %p57 = scmp.ne.s32.totalorder %s43, %s44
      %p58 = scmp.eq.s32.totalorder %s22, 1
      %p59 = por %p57, %p58
      %p61 = scmp.ne.s32.totalorder %s44, %s60
      %p62 = scmp.eq.s32.totalorder %s22, 0
      %p63 = por %p61, %p62
      %s65 = sadd.s32 %s64, 1
      %p68 = scmp.eq.s32.totalorder %s16, 1
      %p69 = scmp.ne.s32.totalorder %s64, %s66
      %p70 = scmp.eq.s32.totalorder %s16, 0
      %p71 = por %p69, %p70
      %p72 = scmp.ne.s32.totalorder %s64, %s66
      %p73 = scmp.eq.s32.totalorder %s21, 1
      %p74 = por %p72, %p73
      %p75 = scmp.ne.s32.totalorder %s66, %s67
      %p76 = scmp.eq.s32.totalorder %s21, 0
      %p77 = por %p75, %p76
      %p78 = scmp.ne.s32.totalorder %s66, %s67
      %p79 = scmp.eq.s32.totalorder %s22, 1
      %p80 = por %p78, %p79
      %p82 = scmp.ne.s32.totalorder %s67, %s81
      %p83 = scmp.eq.s32.totalorder %s22, 0
      %p84 = por %p82, %p83
      %s86 = sadd.s32 %s85, 1
      %p89 = scmp.eq.s32.totalorder %s16, 1
      %p90 = scmp.ne.s32.totalorder %s85, %s87
      %p91 = scmp.eq.s32.totalorder %s16, 0
      %p92 = por %p90, %p91
      %p93 = scmp.ne.s32.totalorder %s85, %s87
      %p94 = scmp.eq.s32.totalorder %s21, 1
      %p95 = por %p93, %p94
      %p96 = scmp.ne.s32.totalorder %s87, %s88
      %p97 = scmp.eq.s32.totalorder %s21, 0
      %p98 = por %p96, %p97
      %p99 = scmp.ne.s32.totalorder %s87, %s88
      %p100 = scmp.eq.s32.totalorder %s22, 1
      %p101 = por %p99, %p100
      %p103 = scmp.ne.s32.totalorder %s88, %s102
      %p104 = scmp.eq.s32.totalorder %s22, 0
      %p105 = por %p103, %p104
      %s106 = ssub.s32 %s23, %s35
      %s107 = ssub.s32 %s24, %s31
      %s108 = sor.u32 %s106, %s107
      %p109 = scmp.eq.s32.totalorder %s108, 0
      %s111 = sadd.s32 %s110, 1
      %s112 = scalar_select %p109, %s110, %s111
      %p115 = pneg %p109
      %p116 = scmp.eq.s32.totalorder %s16, 1
      %p117 = por %p115, %p116
      %p118 = scmp.ne.s32.totalorder %s110, %s113
      %p119 = scmp.eq.s32.totalorder %s16, 0
      %p120 = por %p118, %p119
      %p121 = scmp.ne.s32.totalorder %s110, %s113
      %p122 = scmp.eq.s32.totalorder %s21, 1
      %p123 = por %p121, %p122
      %p124 = scmp.ne.s32.totalorder %s113, %s114
      %p125 = scmp.eq.s32.totalorder %s21, 0
      %p126 = por %p124, %p125
      %p127 = scmp.ne.s32.totalorder %s113, %s114
      %p128 = scmp.eq.s32.totalorder %s22, 1
      %p129 = por %p127, %p128
      %p131 = scmp.ne.s32.totalorder %s114, %s130
      %p132 = scmp.eq.s32.totalorder %s22, 0
      %p133 = por %p131, %p132
      %p134 = scmp.le.s32.totalorder 1, %s16
      %p135 = scmp.lt.s32.totalorder %s16, 3
      %p136 = pnand %p134, %p135
      %p137 = pneg %p136
      // Predicated region
      $region9: #{tpu_custom_call.1} parent=5 // pred_check
        _
      $region10: #{tpu_custom_call.1} parent=5 // pred_check_branch
        %139 = sbr.rel (%p136) target = $region12
      $region11: #{tpu_custom_call.1} parent=5 // pred_region
        %s140 = ssub.s32 %s16, 1
        // Predicated region
        $region13: #{tpu_custom_call.1} parent=11 // pred_check
          %p141 = pneg %p77
        $region14: #{tpu_custom_call.1} parent=11 // pred_check_branch
          %143 = sbr.rel (%p141) target = $region16
        $region15: #{tpu_custom_call.1} parent=11 // pred_region
          %s145 = ssub.s32 3072, 3072
          %146 = vsyncadd [#allocation6], %s145
          %s147 = sshll.u32 [#allocation5], 4
          %s148 = int_to_ptr.vmem [resolvable:$true] %s147
          %153 = dma.hbm_to_vmem [thread:$0]  %s1, 3072, %s148, [#allocation6], 768, 768, 48
        $region16: #{tpu_custom_call.1} parent=11 // pred_fallthru
          _
        // Predicated region
        $region17: #{tpu_custom_call.1} parent=11 // pred_check
          %p154 = pneg %p98
        $region18: #{tpu_custom_call.1} parent=11 // pred_check_branch
          %156 = sbr.rel (%p154) target = $region20
        $region19: #{tpu_custom_call.1} parent=11 // pred_region
          _
        $region20: #{tpu_custom_call.1} parent=11 // pred_fallthru
          _
      $region12: #{tpu_custom_call.1} parent=5 // pred_fallthru
        _
      %p157 = scmp.lt.s32.totalorder %s16, 2
      // Predicated region
      $region21: #{tpu_custom_call.1} parent=5 // pred_check
        %p158 = pneg %p157
      $region22: #{tpu_custom_call.1} parent=5 // pred_check_branch
        %160 = sbr.rel (%p158) target = $region24
      $region23: #{tpu_custom_call.1} parent=5 // pred_region
        // Predicated region
        $region25: #{tpu_custom_call.1} parent=23 // pred_check
          %p161 = pneg %p50
        $region26: #{tpu_custom_call.1} parent=23 // pred_check_branch
          %163 = sbr.rel (%p161) target = $region28
        $region27: #{tpu_custom_call.1} parent=23 // pred_region
          %s164 = sand.u32 %s40, 1
          %s165 = scalar_lea.sflag [#allocation3], %s164
          %s166 = sand.u32 %s40, 1
          %s167 = smul.addr %s166, 4
          %s168 = scalar_lea.vmem [#allocation2], %s167
          %s170 = ssub.s32 64, 64
          %171 = vsyncadd %s165, %s170
          %s172 = sadd.s32 %s24, %s23
          %s173 = smul.addr %s172, 64
          %s174 = scalar_lea.hbm %s0, %s173
          %s176 = sshll.u32 %s168, 4
          %s177 = int_to_ptr.vmem [resolvable:$true] %s176
          %179 = dma.hbm_to_vmem [thread:$0]  %s174, 64, %s177, %s165
        $region28: #{tpu_custom_call.1} parent=23 // pred_fallthru
          _
      $region24: #{tpu_custom_call.1} parent=5 // pred_fallthru
        _
      %p180 = scmp.le.s32.totalorder 1, %s16
      %p181 = scmp.lt.s32.totalorder %s16, 3
      %p182 = pnand %p180, %p181
      %p183 = pneg %p182
      // Predicated region
      $region29: #{tpu_custom_call.1} parent=5 // pred_check
        _
      $region30: #{tpu_custom_call.1} parent=5 // pred_check_branch
        %185 = sbr.rel (%p182) target = $region32
      $region31: #{tpu_custom_call.1} parent=5 // pred_region
        %s186 = ssub.s32 %s16, 1
        %s187 = sand.u32 %s43, 1
        %s188 = scalar_lea.sflag [#allocation3], %s187
        %s189 = sand.u32 %s43, 1
        %s190 = smul.addr %s189, 4
        %s191 = scalar_lea.vmem [#allocation2], %s190
        // Predicated region
        $region33: #{tpu_custom_call.1} parent=31 // pred_check
          %p192 = pneg %p56
        $region34: #{tpu_custom_call.1} parent=31 // pred_check_branch
          %194 = sbr.rel (%p192) target = $region36
        $region35: #{tpu_custom_call.1} parent=31 // pred_region
          %195 = dma.done %s188, 64
        $region36: #{tpu_custom_call.1} parent=31 // pred_fallthru
          _
        // Predicated region
        $region37: #{tpu_custom_call.1} parent=31 // pred_check
          %p196 = pneg %p77
        $region38: #{tpu_custom_call.1} parent=31 // pred_check_branch
          %198 = sbr.rel (%p196) target = $region40
        $region39: #{tpu_custom_call.1} parent=31 // pred_region
          %199 = dma.done [#allocation6], 3072
        $region40: #{tpu_custom_call.1} parent=31 // pred_fallthru
          _
        %s200 = sand.u32 %s43, 1
        %s201 = scalar_lea.sflag [#allocation3], %s200
        %s202 = sand.u32 %s43, 1
        %s203 = smul.addr %s202, 4
        %s204 = scalar_lea.vmem [#allocation2], %s203
        %p205 = pneg %p56
        %p206 = pneg %p53
        %p207 = pneg %p77
        %p208 = pneg %p74
        %p209 = pneg %p98
        %p210 = pneg %p95
        %p211 = pneg %p126
        %p212 = pneg %p123
        %s213 = sand.u32 %s113, 1
        %s214 = scalar_lea.sflag [#allocation4], %s213
        %s215 = sand.u32 %s113, 1
        %s216 = smul.addr %s215, 24
        %s217 = scalar_lea.vmem [#allocation7], %s216
        %v218 = vld [vmem:[%s191] sm:$0xf]
        %v219 = vld [vmem:[#allocation5] sm:$0xff]
        %v220 = vld [vmem:[#allocation5 + $0x8] sm:$0xff]
        %v221 = vld [vmem:[#allocation5 + $0x10] sm:$0xff]
        %v222 = vld [vmem:[#allocation5 + $0x18] sm:$0xff]
        %v223 = vld [vmem:[#allocation5 + $0x20] sm:$0xff]
        %v224 = vld [vmem:[#allocation5 + $0x28] sm:$0xff]
        %v225 = vld [vmem:[#allocation5 + $0x30] sm:$0xff]
        %v226 = vld [vmem:[#allocation5 + $0x38] sm:$0xff]
        %v227 = vld [vmem:[#allocation5 + $0x40] sm:$0xff]
        %v228 = vld [vmem:[#allocation5 + $0x48] sm:$0xff]
        %v229 = vld [vmem:[#allocation5 + $0x50] sm:$0xff]
        %v230 = vld [vmem:[#allocation5 + $0x58] sm:$0xff]
        %v231 = vld [vmem:[#allocation5 + $0x60] sm:$0xff]
        %v232 = vld [vmem:[#allocation5 + $0x68] sm:$0xff]
        %v233 = vld [vmem:[#allocation5 + $0x70] sm:$0xff]
        %v234 = vld [vmem:[#allocation5 + $0x78] sm:$0xff]
        %v235 = vld [vmem:[#allocation5 + $0x80] sm:$0xff]
        %v236 = vld [vmem:[#allocation5 + $0x88] sm:$0xff]
        %v237 = vld [vmem:[#allocation5 + $0x90] sm:$0xff]
        %v238 = vld [vmem:[#allocation5 + $0x98] sm:$0xff]
        %v239 = vld [vmem:[#allocation5 + $0xa0] sm:$0xff]
        %v240 = vld [vmem:[#allocation5 + $0xa8] sm:$0xff]
        %v241 = vld [vmem:[#allocation5 + $0xb0] sm:$0xff]
        %v242 = vld [vmem:[#allocation5 + $0xb8] sm:$0xff]
        %v243 = vld [vmem:[%s2] sm:$0x3f]
        %v245 = vlaneseq
        %v246 = vshrl.u32 %v245, 7
        %v247 = vsub.s32 0, %v246
        %v248 = vrot.slane %v243, %v247
        %v249 = vlaneseq
        %v250 = vshrl.u32 %v249, 7
        %v251 = vsub.s32 1, %v250
        %v252 = vrot.slane %v243, %v251
        %v253 = vlaneseq
        %v254 = vshrl.u32 %v253, 7
        %v255 = vsub.s32 2, %v254
        %v256 = vrot.slane %v243, %v255
        %v257 = vlaneseq
        %v258 = vshrl.u32 %v257, 7
        %v259 = vsub.s32 3, %v258
        %v260 = vrot.slane %v243, %v259
        %v261 = vlaneseq
        %v262 = vshrl.u32 %v261, 7
        %v263 = vsub.s32 4, %v262
        %v264 = vrot.slane %v243, %v263
        %v265 = vlaneseq
        %v266 = vshrl.u32 %v265, 7
        %v267 = vsub.s32 5, %v266
        %v268 = vrot.slane %v243, %v267
        %vm275 = vcmask 261120
        %v277 = vsel %vm275, %v218, 0
        %279 = vmatprep.subr.mxu0 %v220
        %280 = vmatpush1.msra.mxu0 %v219
        %281 = vmatprep.subr.mxu0 %v226
        %282 = vmatpush1.msra.mxu0 %v225
        %283 = vmatprep.subr.mxu0 %v232
        %284 = vmatpush1.msra.mxu0 %v231
        %285 = vmatprep.subr.mxu0 %v238
        %286 = vmatpush1.msra.mxu0 %v237
        %287 = vmatprep.subr.mxu0 0.0
        %288 = vmatpush1.msra.mxu0 0.0
        %289 = vmatprep.subr.mxu0 0.0
        %290 = vmatpush1.msra.mxu0 0.0
        %291 = vmatprep.subr.mxu0 0.0
        %292 = vmatpush1.msra.mxu0 0.0
        %293 = vmatprep.subr.mxu0 0.0
        %294 = vmatpush1.msra.mxu0 0.0
        %295 = vmatprep.subr.mxu0 0.0
        %296 = vmatpush1.msra.mxu0 0.0
        %297 = vmatprep.subr.mxu0 0.0
        %298 = vmatpush1.msra.mxu0 0.0
        %299 = vmatprep.subr.mxu0 0.0
        %300 = vmatpush1.msra.mxu0 0.0
        %301 = vmatprep.subr.mxu0 0.0
        %302 = vmatpush1.msra.mxu0 0.0
        %303 = vmatprep.subr.mxu0 0.0
        %304 = vmatpush1.msra.mxu0 0.0
        %305 = vmatprep.subr.mxu0 0.0
        %306 = vmatpush1.msra.mxu0 0.0
        %307 = vmatprep.subr.mxu0 0.0
        %308 = vmatpush1.msra.mxu0 0.0
        %309 = vmatprep.subr.mxu0 0.0
        %310 = vmatpush1.msra.mxu0 0.0
        %311 = vmatprep.subr.mxu0 0.0
        %312 = vmatpush1.msra.mxu0 0.0
        %313 = vmatprep.subr.mxu0 0.0
        %314 = vmatpush1.msra.mxu0 0.0
        %315 = vmatprep.subr.mxu0 0.0
        %316 = vmatpush1.msra.mxu0 0.0
        %317 = vmatprep.subr.mxu0 0.0
        %318 = vmatpush1.msra.mxu0 0.0
        %319 = vmatprep.subr.mxu0 0.0
        %320 = vmatpush1.msra.mxu0 0.0
        %321 = vmatprep.subr.mxu0 0.0
        %322 = vmatpush1.msra.mxu0 0.0
        %323 = vmatprep.subr.mxu0 0.0
        %324 = vmatpush1.msra.mxu0 0.0
        %325 = vmatprep.subr.mxu0 0.0
        %326 = vmatpush1.msra.mxu0 0.0
        %327 = vmatprep.subr.mxu0 0.0
        %328 = vmatpush1.msra.mxu0 0.0
        %329 = vmatprep.subr.mxu0 0.0
        %330 = vmatpush1.msra.mxu0 0.0
        %331 = vmatprep.subr.mxu0 0.0
        %332 = vmatpush1.msra.mxu0 0.0
        %333 = vmatprep.subr.mxu0 0.0
        %334 = vmatpush1.msra.mxu0 0.0
        %335 = vmatprep.subr.mxu0 0.0
        %336 = vmatpush1.msra.mxu0 0.0
        %337 = vmatprep.subr.mxu0 0.0
        %338 = vmatpush1.msra.mxu0 0.0
        %339 = vmatprep.subr.mxu0 0.0
        %340 = vmatpush1.msra.mxu0 0.0
        %341 = vmatprep.subr.mxu0 0.0
        %342 = vmatpush1.msra.mxu0 0.0
        %343 = vmatprep.mubr.f32.mxu0 0.0
        %344 = vmatmul.mubr.f32.gmra.mrb[0].mxu0 %v277
        %v345 = vpop.f32.mrb[0].mxu0
        %v346 = vadd.f32 %v248, %v345
        %v347 = vpop.f32.mrb[0].mxu0
        %v348 = vadd.f32 %v252, %v347
        %349 = vdwg.mxu0
        %350 = vmatprep.subr.mxu0 %v222
        %351 = vmatpush1.msra.mxu0 %v221
        %352 = vmatprep.subr.mxu0 %v228
        %353 = vmatpush1.msra.mxu0 %v227
        %354 = vmatprep.subr.mxu0 %v234
        %355 = vmatpush1.msra.mxu0 %v233
        %356 = vmatprep.subr.mxu0 %v240
        %357 = vmatpush1.msra.mxu0 %v239
        %358 = vmatprep.subr.mxu0 0.0
        %359 = vmatpush1.msra.mxu0 0.0
        %360 = vmatprep.subr.mxu0 0.0
        %361 = vmatpush1.msra.mxu0 0.0
        %362 = vmatprep.subr.mxu0 0.0
        %363 = vmatpush1.msra.mxu0 0.0
        %364 = vmatprep.subr.mxu0 0.0
        %365 = vmatpush1.msra.mxu0 0.0
        %366 = vmatprep.subr.mxu0 0.0
        %367 = vmatpush1.msra.mxu0 0.0
        %368 = vmatprep.subr.mxu0 0.0
        %369 = vmatpush1.msra.mxu0 0.0
        %370 = vmatprep.subr.mxu0 0.0
        %371 = vmatpush1.msra.mxu0 0.0
        %372 = vmatprep.subr.mxu0 0.0
        %373 = vmatpush1.msra.mxu0 0.0
        %374 = vmatprep.subr.mxu0 0.0
        %375 = vmatpush1.msra.mxu0 0.0
        %376 = vmatprep.subr.mxu0 0.0
        %377 = vmatpush1.msra.mxu0 0.0
        %378 = vmatprep.subr.mxu0 0.0
        %379 = vmatpush1.msra.mxu0 0.0
        %380 = vmatprep.subr.mxu0 0.0
        %381 = vmatpush1.msra.mxu0 0.0
        %382 = vmatprep.subr.mxu0 0.0
        %383 = vmatpush1.msra.mxu0 0.0
        %384 = vmatprep.subr.mxu0 0.0
        %385 = vmatpush1.msra.mxu0 0.0
        %386 = vmatprep.subr.mxu0 0.0
        %387 = vmatpush1.msra.mxu0 0.0
        %388 = vmatprep.subr.mxu0 0.0
        %389 = vmatpush1.msra.mxu0 0.0
        %390 = vmatprep.subr.mxu0 0.0
        %391 = vmatpush1.msra.mxu0 0.0
        %392 = vmatprep.subr.mxu0 0.0
        %393 = vmatpush1.msra.mxu0 0.0
        %394 = vmatprep.subr.mxu0 0.0
        %395 = vmatpush1.msra.mxu0 0.0
        %396 = vmatprep.subr.mxu0 0.0
        %397 = vmatpush1.msra.mxu0 0.0
        %398 = vmatprep.subr.mxu0 0.0
        %399 = vmatpush1.msra.mxu0 0.0
        %400 = vmatprep.subr.mxu0 0.0
        %401 = vmatpush1.msra.mxu0 0.0
        %402 = vmatprep.subr.mxu0 0.0
        %403 = vmatpush1.msra.mxu0 0.0
        %404 = vmatprep.subr.mxu0 0.0
        %405 = vmatpush1.msra.mxu0 0.0
        %406 = vmatprep.subr.mxu0 0.0
        %407 = vmatpush1.msra.mxu0 0.0
        %408 = vmatprep.subr.mxu0 0.0
        %409 = vmatpush1.msra.mxu0 0.0
        %410 = vmatprep.subr.mxu0 0.0
        %411 = vmatpush1.msra.mxu0 0.0
        %412 = vmatprep.subr.mxu0 0.0
        %413 = vmatpush1.msra.mxu0 0.0
        %414 = vmatprep.mubr.f32.mxu0 0.0
        %415 = vmatmul.mubr.f32.gmra.mrb[0].mxu0 %v277
        %v416 = vpop.f32.mrb[0].mxu0
        %v417 = vadd.f32 %v256, %v416
        %v418 = vpop.f32.mrb[0].mxu0
        %v419 = vadd.f32 %v260, %v418
        %420 = vdwg.mxu0
        %421 = vmatprep.subr.mxu0 %v224
        %422 = vmatpush1.msra.mxu0 %v223
        %423 = vmatprep.subr.mxu0 %v230
        %424 = vmatpush1.msra.mxu0 %v229
        %425 = vmatprep.subr.mxu0 %v236
        %426 = vmatpush1.msra.mxu0 %v235
        %427 = vmatprep.subr.mxu0 %v242
        %428 = vmatpush1.msra.mxu0 %v241
        %429 = vmatprep.subr.mxu0 0.0
        %430 = vmatpush1.msra.mxu0 0.0
        %431 = vmatprep.subr.mxu0 0.0
        %432 = vmatpush1.msra.mxu0 0.0
        %433 = vmatprep.subr.mxu0 0.0
        %434 = vmatpush1.msra.mxu0 0.0
        %435 = vmatprep.subr.mxu0 0.0
        %436 = vmatpush1.msra.mxu0 0.0
        %437 = vmatprep.subr.mxu0 0.0
        %438 = vmatpush1.msra.mxu0 0.0
        %439 = vmatprep.subr.mxu0 0.0
        %440 = vmatpush1.msra.mxu0 0.0
        %441 = vmatprep.subr.mxu0 0.0
        %442 = vmatpush1.msra.mxu0 0.0
        %443 = vmatprep.subr.mxu0 0.0
        %444 = vmatpush1.msra.mxu0 0.0
        %445 = vmatprep.subr.mxu0 0.0
        %446 = vmatpush1.msra.mxu0 0.0
        %447 = vmatprep.subr.mxu0 0.0
        %448 = vmatpush1.msra.mxu0 0.0
        %449 = vmatprep.subr.mxu0 0.0
        %450 = vmatpush1.msra.mxu0 0.0
        %451 = vmatprep.subr.mxu0 0.0
        %452 = vmatpush1.msra.mxu0 0.0
        %453 = vmatprep.subr.mxu0 0.0
        %454 = vmatpush1.msra.mxu0 0.0
        %455 = vmatprep.subr.mxu0 0.0
        %456 = vmatpush1.msra.mxu0 0.0
        %457 = vmatprep.subr.mxu0 0.0
        %458 = vmatpush1.msra.mxu0 0.0
        %459 = vmatprep.subr.mxu0 0.0
        %460 = vmatpush1.msra.mxu0 0.0
        %461 = vmatprep.subr.mxu0 0.0
        %462 = vmatpush1.msra.mxu0 0.0
        %463 = vmatprep.subr.mxu0 0.0
        %464 = vmatpush1.msra.mxu0 0.0
        %465 = vmatprep.subr.mxu0 0.0
        %466 = vmatpush1.msra.mxu0 0.0
        %467 = vmatprep.subr.mxu0 0.0
        %468 = vmatpush1.msra.mxu0 0.0
        %469 = vmatprep.subr.mxu0 0.0
        %470 = vmatpush1.msra.mxu0 0.0
        %471 = vmatprep.subr.mxu0 0.0
        %472 = vmatpush1.msra.mxu0 0.0
        %473 = vmatprep.subr.mxu0 0.0
        %474 = vmatpush1.msra.mxu0 0.0
        %475 = vmatprep.subr.mxu0 0.0
        %476 = vmatpush1.msra.mxu0 0.0
        %477 = vmatprep.subr.mxu0 0.0
        %478 = vmatpush1.msra.mxu0 0.0
        %479 = vmatprep.subr.mxu0 0.0
        %480 = vmatpush1.msra.mxu0 0.0
        %481 = vmatprep.subr.mxu0 0.0
        %482 = vmatpush1.msra.mxu0 0.0
        %483 = vmatprep.subr.mxu0 0.0
        %484 = vmatpush1.msra.mxu0 0.0
        %485 = vmatprep.mubr.f32.mxu0 0.0
        %486 = vmatmul.mubr.f32.gmra.mrb[0].mxu0 %v277
        %v487 = vpop.f32.mrb[0].mxu0
        %v488 = vadd.f32 %v264, %v487
        %v489 = vpop.f32.mrb[0].mxu0
        %v490 = vadd.f32 %v268, %v489
        %491 = vdwg.mxu0
        %v494 = vcombine.low %v346, %v348
        %496 = vst [vmem:[%s217] sm:$0xff] %v494
        %v499 = vcombine.low %v417, %v419
        %s501 = scalar_lea.vmem %s217, 8 [#allocation7]
        %502 = vst [vmem:[%s501] sm:$0xff] %v499
        %v505 = vcombine.low %v488, %v490
        %s507 = scalar_lea.vmem %s217, 16 [#allocation7]
        %508 = vst [vmem:[%s507] sm:$0xff] %v505
        %s509 = sand.u32 %s113, 1
        %s510 = scalar_lea.sflag [#allocation4], %s509
        %s511 = sand.u32 %s113, 1
        %s512 = smul.addr %s511, 24
        %s513 = scalar_lea.vmem [#allocation7], %s512
        // Predicated region
        $region41: #{tpu_custom_call.1} parent=31 // pred_check
          %p514 = pneg %p123
        $region42: #{tpu_custom_call.1} parent=31 // pred_check_branch
          %516 = sbr.rel (%p514) target = $region44
        $region43: #{tpu_custom_call.1} parent=31 // pred_region
          %s518 = ssub.s32 384, 384
          %519 = vsyncadd %s510, %s518
          %s520 = smul.addr %s26, 2
          %s521 = smul.addr %s25, 6
          %s522 = sadd.s32 %s520, %s521
          %s523 = smul.addr %s522, 64
          %s524 = scalar_lea.hbm %s3, %s523
          %s525 = sshll.u32 %s513, 4
          %s526 = int_to_ptr.vmem [resolvable:$true] %s525
          %531 = dma.vmem_to_hbm [thread:$0]  %s526, 384, %s524, %s510, 128, 128, 8
        $region44: #{tpu_custom_call.1} parent=31 // pred_fallthru
          _
      $region32: #{tpu_custom_call.1} parent=5 // pred_fallthru
        _
      %p532 = scmp.le.s32.totalorder 2, %s16
      // Predicated region
      $region45: #{tpu_custom_call.1} parent=5 // pred_check
        %p533 = pneg %p532
      $region46: #{tpu_custom_call.1} parent=5 // pred_check_branch
        %535 = sbr.rel (%p533) target = $region48
      $region47: #{tpu_custom_call.1} parent=5 // pred_region
        %s536 = ssub.s32 %s16, 2
        // Predicated region
        $region49: #{tpu_custom_call.1} parent=47 // pred_check
          %p537 = pneg %p129
        $region50: #{tpu_custom_call.1} parent=47 // pred_check_branch
          %539 = sbr.rel (%p537) target = $region52
        $region51: #{tpu_custom_call.1} parent=47 // pred_region
          %s540 = sand.u32 %s114, 1
          %s541 = scalar_lea.sflag [#allocation4], %s540
          %s542 = sand.u32 %s114, 1
          %s543 = smul.addr %s542, 24
          %s544 = scalar_lea.vmem [#allocation7], %s543
          %545 = dma.done %s541, 384
        $region52: #{tpu_custom_call.1} parent=47 // pred_fallthru
          _
      $region48: #{tpu_custom_call.1} parent=5 // pred_fallthru
        _
    $region6: #{tpu_custom_call.1} parent=1 // loop_footer
      %s20 = sadd.s32 1, %s16
    $region7: #{tpu_custom_call.1} parent=1 // loop_footer_branch
      %15 = sbr.rel target = $region3
    $region8: #{tpu_custom_call.1} parent=1 // loop_exit
      _
    %546 = vsyncpa [#allocation3], 1
    %s547 = scalar_lea.sflag [#allocation3], 1
    %548 = vsyncpa %s547, 1
    %549 = vsyncpa [#allocation6], 1
    %550 = vsyncpa [#allocation4], 1
    %s551 = scalar_lea.sflag [#allocation4], 1
    %552 = vsyncpa %s551, 1

</llo_original>
